<compile_context>
chip_gen: v7x
topology: tpu7x:2x2x1
jax: 0.10.0
libtpu: 0.0.40
codegen_flags: <defaults>
</compile_context>

<pallas_src>
import functools

import jax
import jax.numpy as jnp
from jax import lax
from jax.experimental import pallas as pl
from jax.experimental.pallas import tpu as pltpu

_LN_EPS = 1e-5
_NEG_BIG = -1e30  # padded-class bias -> exp underflows to exactly 0 in the softmax


def _head_kernel(ns, d, cls_ref, gamma_ref, beta_ref, w_ref, b_ref, out_ref):
    """Single-step fused kernel: per-sequence LayerNorm -> one concat-K matmul -> softmax.

    cls_ref:   (B, ns*D) f32   CLS tokens of all sequences, concatenated along D
    gamma_ref: (1, ns*D) f32   per-sequence LayerNorm scales, concatenated
    beta_ref:  (1, ns*D) f32   per-sequence LayerNorm shifts, concatenated
    w_ref:     (ns*D, Cp) bf16 block-stacked Linear weights (zero-padded classes)
    b_ref:     (1, Cp)   f32   sum_i bias_i (padded classes = -1e30)
    out_ref:   (B, Cp)   f32   softmax(sum_i Linear_i(LN_i(cls_i)))  (padded classes = 0)
    """
    segs = []
    for n in range(ns):                       # trace-time unrolled; ns is small & static
        lo, hi = n * d, (n + 1) * d           # 128-lane-aligned static slices (free views)
        x = cls_ref[:, lo:hi]                 # (B, D)
        g = gamma_ref[:, lo:hi]               # (1, D)
        bt = beta_ref[:, lo:hi]               # (1, D)
        # One-pass LayerNorm statistics (PyTorch nn.LayerNorm: biased variance, eps=1e-5).
        s1 = jnp.sum(x, axis=-1, keepdims=True)
        s2 = jnp.sum(x * x, axis=-1, keepdims=True)
        mean = s1 * (1.0 / d)
        var = jnp.maximum(s2 * (1.0 / d) - mean * mean, 0.0)
        xn = (x - mean) * lax.rsqrt(var + _LN_EPS)
        segs.append(xn * g + bt)

    # Concatenate the normalized CLS tokens along the lane axis (128-aligned segments)
    # and do ONE MXU matmul with K = ns*D; bf16 operands, f32 accumulation.
    xn_cat = jnp.concatenate(segs, axis=-1).astype(jnp.bfloat16)        # (B, ns*D)
    logits = jnp.dot(xn_cat, w_ref[...], preferred_element_type=jnp.float32)
    logits = logits + b_ref[...]              # biases pre-summed over sequences (hoisted)

    # Softmax over classes (nn.Softmax(dim=1) on (B, C)); padded columns -> exactly 0.
    m = jnp.max(logits, axis=-1, keepdims=True)
    e = jnp.exp(logits - m)
    denom = jnp.sum(e, axis=-1, keepdims=True)
    out_ref[...] = (e * pl.reciprocal(denom, approx=True)).astype(out_ref.dtype)


@jax.jit
def multi_sequence_head(xs, gamma, beta, w, b):
    """xs: tuple of num_seq arrays (B, S, D); gamma/beta: (NS, D); w: (NS, D, C); b: (NS, C).

    Returns softmax(sum_i Linear_i(LN_i(xs[i][:, 0, :]))) of shape (B, C).
    """
    ns = len(xs)
    bsz, _, d = xs[0].shape
    c = w.shape[-1]
    c_pad = ((c + 127) // 128) * 128          # lane-dense output / matmul N dimension

    # CLS tokens only (no full-sequence stack materialized), concatenated along D.
    cls_cat = jnp.concatenate([x[:, 0, :] for x in xs], axis=-1).astype(jnp.float32)
    gamma_cat = gamma.reshape(1, ns * d).astype(jnp.float32)
    beta_cat = beta.reshape(1, ns * d).astype(jnp.float32)

    # Fold the "sum" logit join into one matmul: block-stack weights along K, bf16 for MXU.
    w_cat = jnp.pad(w.reshape(ns * d, c), ((0, 0), (0, c_pad - c))).astype(jnp.bfloat16)
    # Pre-sum biases over sequences; padded class columns get -1e30 (softmax -> 0).
    b_sum = jnp.sum(b.astype(jnp.float32), axis=0)                      # (C,)
    b_pad = jnp.full((1, c_pad), _NEG_BIG, jnp.float32).at[0, :c].set(b_sum)

    kernel = functools.partial(_head_kernel, ns, d)
    vmem = pltpu.MemorySpace.VMEM
    out_pad = pl.pallas_call(
        kernel,
        out_shape=jax.ShapeDtypeStruct((bsz, c_pad), jnp.float32),
        in_specs=[pl.BlockSpec(memory_space=vmem) for _ in range(5)],
        out_specs=pl.BlockSpec(memory_space=vmem),
    )(cls_cat, gamma_cat, beta_cat, w_cat, b_pad)
    return out_pad[:, :c]


def _reference(xs, gamma, beta, w, b):
    """Pure-JAX (f32, two-pass LN) reference of the same forward path."""
    logits = 0.0
    for i in range(len(xs)):
        cls = xs[i][:, 0, :]
        mean = cls.mean(axis=-1, keepdims=True)
        var = ((cls - mean) ** 2).mean(axis=-1, keepdims=True)
        xn = (cls - mean) / jnp.sqrt(var + _LN_EPS)
        xn = xn * gamma[i] + beta[i]
        logits = logits + xn @ w[i] + b[i]
    return jax.nn.softmax(logits, axis=1)


if __name__ == "__main__":
    # Small, module-consistent shapes: num_sequences=3 multi-sampling-rate inputs,
    # batch=2, seq tokens=8, embed dim=128 (stands in for 768), num_classes=8.
    NS, B, S, D, C = 3, 2, 8, 128, 8

    key = jax.random.PRNGKey(0)
    k_x = jax.random.split(key, NS)
    k_g, k_be, k_w, k_b = jax.random.split(jax.random.fold_in(key, 1234), 4)

    xs = tuple(
        jax.random.normal(k_x[i], (B, S, D), dtype=jnp.float32) for i in range(NS)
    )

    # LayerNorm params per sequence head (perturbed from PyTorch default weight=1, bias=0
    # so the affine path is actually exercised).
    gamma = 1.0 + 0.05 * jax.random.normal(k_g, (NS, D), jnp.float32)
    beta = 0.05 * jax.random.normal(k_be, (NS, D), jnp.float32)

    # Linear(D -> num_classes) per sequence head; deterministic uniform init matching
    # PyTorch's default bound 1/sqrt(fan_in). Stored transposed as (D, C).
    bound = 1.0 / (D ** 0.5)
    w = jax.random.uniform(k_w, (NS, D, C), jnp.float32, minval=-bound, maxval=bound)
    b = jax.random.uniform(k_b, (NS, C), jnp.float32, minval=-bound, maxval=bound)

    out = multi_sequence_head(xs, gamma, beta, w, b)
    out = jax.block_until_ready(out)

    ref = _reference(xs, gamma, beta, w, b)
    assert out.shape == (B, C), out.shape
    # bf16 MXU operands + approx reciprocal -> loosened tolerance vs the f32 reference.
    assert jnp.allclose(out, ref, atol=2e-2, rtol=2e-2), (out, ref)

    # TODO(synk): cross_attention / MultiScaleEncoder branch and save_cls_tokens file I/O
    # are external / side-effecting and are not part of this kernel.
    print("KERNEL_OK")
</pallas_src>

<mosaic_0001>
module attributes {stable_mosaic.version = 11 : i64} {
  func.func @_head_kernel(%arg0: memref<2x384xf32, #tpu.memory_space<vmem>>, %arg1: memref<1x384xf32, #tpu.memory_space<vmem>>, %arg2: memref<1x384xf32, #tpu.memory_space<vmem>>, %arg3: memref<384x128xbf16, #tpu.memory_space<vmem>>, %arg4: memref<1x128xf32, #tpu.memory_space<vmem>>, %arg5: memref<2x128xf32, #tpu.memory_space<vmem>>) attributes {dimension_semantics = [], scalar_prefetch = 0 : i64, scratch_operands = 0 : i64, tpu.core_type = #tpu.core_type<tc>} {
    %c0 = arith.constant 0 : index
    %c0_0 = arith.constant 0 : index
    %0 = vector.load %arg0[%c0, %c0_0] : memref<2x384xf32, #tpu.memory_space<vmem>>, vector<2x128xf32>
    %c0_1 = arith.constant 0 : index
    %c0_2 = arith.constant 0 : index
    %1 = vector.load %arg1[%c0_1, %c0_2] : memref<1x384xf32, #tpu.memory_space<vmem>>, vector<1x128xf32>
    %c0_3 = arith.constant 0 : index
    %c0_4 = arith.constant 0 : index
    %2 = vector.load %arg2[%c0_3, %c0_4] : memref<1x384xf32, #tpu.memory_space<vmem>>, vector<1x128xf32>
    %cst = arith.constant dense<0.000000e+00> : vector<2xf32>
    %3 = vector.multi_reduction <add>, %0, %cst [1] : vector<2x128xf32> to vector<2xf32>
    %4 = vector.shape_cast %3 : vector<2xf32> to vector<2x1xf32>
    %5 = arith.mulf %0, %0 : vector<2x128xf32>
    %cst_5 = arith.constant dense<0.000000e+00> : vector<2xf32>
    %6 = vector.multi_reduction <add>, %5, %cst_5 [1] : vector<2x128xf32> to vector<2xf32>
    %7 = vector.shape_cast %6 : vector<2xf32> to vector<2x1xf32>
    %cst_6 = arith.constant 7.812500e-03 : f32
    %8 = vector.broadcast %cst_6 : f32 to vector<2x1xf32>
    %9 = arith.mulf %4, %8 : vector<2x1xf32>
    %cst_7 = arith.constant 7.812500e-03 : f32
    %10 = vector.broadcast %cst_7 : f32 to vector<2x1xf32>
    %11 = arith.mulf %7, %10 : vector<2x1xf32>
    %12 = arith.mulf %9, %9 : vector<2x1xf32>
    %13 = arith.subf %11, %12 : vector<2x1xf32>
    %cst_8 = arith.constant 0.000000e+00 : f32
    %14 = vector.broadcast %cst_8 : f32 to vector<2x1xf32>
    %15 = arith.maximumf %13, %14 : vector<2x1xf32>
    %16 = vector.broadcast %9 : vector<2x1xf32> to vector<2x128xf32>
    %17 = arith.subf %0, %16 : vector<2x128xf32>
    %cst_9 = arith.constant 9.99999974E-6 : f32
    %18 = vector.broadcast %cst_9 : f32 to vector<2x1xf32>
    %19 = arith.addf %15, %18 : vector<2x1xf32>
    %20 = math.rsqrt %19 : vector<2x1xf32>
    %21 = vector.broadcast %20 : vector<2x1xf32> to vector<2x128xf32>
    %22 = arith.mulf %17, %21 : vector<2x128xf32>
    %23 = vector.broadcast %1 : vector<1x128xf32> to vector<2x128xf32>
    %24 = arith.mulf %22, %23 : vector<2x128xf32>
    %25 = vector.broadcast %2 : vector<1x128xf32> to vector<2x128xf32>
    %26 = arith.addf %24, %25 : vector<2x128xf32>
    %c0_10 = arith.constant 0 : index
    %c128 = arith.constant 128 : index
    %27 = vector.load %arg0[%c0_10, %c128] : memref<2x384xf32, #tpu.memory_space<vmem>>, vector<2x128xf32>
    %c0_11 = arith.constant 0 : index
    %c128_12 = arith.constant 128 : index
    %28 = vector.load %arg1[%c0_11, %c128_12] : memref<1x384xf32, #tpu.memory_space<vmem>>, vector<1x128xf32>
    %c0_13 = arith.constant 0 : index
    %c128_14 = arith.constant 128 : index
    %29 = vector.load %arg2[%c0_13, %c128_14] : memref<1x384xf32, #tpu.memory_space<vmem>>, vector<1x128xf32>
    %cst_15 = arith.constant dense<0.000000e+00> : vector<2xf32>
    %30 = vector.multi_reduction <add>, %27, %cst_15 [1] : vector<2x128xf32> to vector<2xf32>
    %31 = vector.shape_cast %30 : vector<2xf32> to vector<2x1xf32>
    %32 = arith.mulf %27, %27 : vector<2x128xf32>
    %cst_16 = arith.constant dense<0.000000e+00> : vector<2xf32>
    %33 = vector.multi_reduction <add>, %32, %cst_16 [1] : vector<2x128xf32> to vector<2xf32>
    %34 = vector.shape_cast %33 : vector<2xf32> to vector<2x1xf32>
    %cst_17 = arith.constant 7.812500e-03 : f32
    %35 = vector.broadcast %cst_17 : f32 to vector<2x1xf32>
    %36 = arith.mulf %31, %35 : vector<2x1xf32>
    %cst_18 = arith.constant 7.812500e-03 : f32
    %37 = vector.broadcast %cst_18 : f32 to vector<2x1xf32>
    %38 = arith.mulf %34, %37 : vector<2x1xf32>
    %39 = arith.mulf %36, %36 : vector<2x1xf32>
    %40 = arith.subf %38, %39 : vector<2x1xf32>
    %cst_19 = arith.constant 0.000000e+00 : f32
    %41 = vector.broadcast %cst_19 : f32 to vector<2x1xf32>
    %42 = arith.maximumf %40, %41 : vector<2x1xf32>
    %43 = vector.broadcast %36 : vector<2x1xf32> to vector<2x128xf32>
    %44 = arith.subf %27, %43 : vector<2x128xf32>
    %cst_20 = arith.constant 9.99999974E-6 : f32
    %45 = vector.broadcast %cst_20 : f32 to vector<2x1xf32>
    %46 = arith.addf %42, %45 : vector<2x1xf32>
    %47 = math.rsqrt %46 : vector<2x1xf32>
    %48 = vector.broadcast %47 : vector<2x1xf32> to vector<2x128xf32>
    %49 = arith.mulf %44, %48 : vector<2x128xf32>
    %50 = vector.broadcast %28 : vector<1x128xf32> to vector<2x128xf32>
    %51 = arith.mulf %49, %50 : vector<2x128xf32>
    %52 = vector.broadcast %29 : vector<1x128xf32> to vector<2x128xf32>
    %53 = arith.addf %51, %52 : vector<2x128xf32>
    %c0_21 = arith.constant 0 : index
    %c256 = arith.constant 256 : index
    %54 = vector.load %arg0[%c0_21, %c256] : memref<2x384xf32, #tpu.memory_space<vmem>>, vector<2x128xf32>
    %c0_22 = arith.constant 0 : index
    %c256_23 = arith.constant 256 : index
    %55 = vector.load %arg1[%c0_22, %c256_23] : memref<1x384xf32, #tpu.memory_space<vmem>>, vector<1x128xf32>
    %c0_24 = arith.constant 0 : index
    %c256_25 = arith.constant 256 : index
    %56 = vector.load %arg2[%c0_24, %c256_25] : memref<1x384xf32, #tpu.memory_space<vmem>>, vector<1x128xf32>
    %cst_26 = arith.constant dense<0.000000e+00> : vector<2xf32>
    %57 = vector.multi_reduction <add>, %54, %cst_26 [1] : vector<2x128xf32> to vector<2xf32>
    %58 = vector.shape_cast %57 : vector<2xf32> to vector<2x1xf32>
    %59 = arith.mulf %54, %54 : vector<2x128xf32>
    %cst_27 = arith.constant dense<0.000000e+00> : vector<2xf32>
    %60 = vector.multi_reduction <add>, %59, %cst_27 [1] : vector<2x128xf32> to vector<2xf32>
    %61 = vector.shape_cast %60 : vector<2xf32> to vector<2x1xf32>
    %cst_28 = arith.constant 7.812500e-03 : f32
    %62 = vector.broadcast %cst_28 : f32 to vector<2x1xf32>
    %63 = arith.mulf %58, %62 : vector<2x1xf32>
    %cst_29 = arith.constant 7.812500e-03 : f32
    %64 = vector.broadcast %cst_29 : f32 to vector<2x1xf32>
    %65 = arith.mulf %61, %64 : vector<2x1xf32>
    %66 = arith.mulf %63, %63 : vector<2x1xf32>
    %67 = arith.subf %65, %66 : vector<2x1xf32>
    %cst_30 = arith.constant 0.000000e+00 : f32
    %68 = vector.broadcast %cst_30 : f32 to vector<2x1xf32>
    %69 = arith.maximumf %67, %68 : vector<2x1xf32>
    %70 = vector.broadcast %63 : vector<2x1xf32> to vector<2x128xf32>
    %71 = arith.subf %54, %70 : vector<2x128xf32>
    %cst_31 = arith.constant 9.99999974E-6 : f32
    %72 = vector.broadcast %cst_31 : f32 to vector<2x1xf32>
    %73 = arith.addf %69, %72 : vector<2x1xf32>
    %74 = math.rsqrt %73 : vector<2x1xf32>
    %75 = vector.broadcast %74 : vector<2x1xf32> to vector<2x128xf32>
    %76 = arith.mulf %71, %75 : vector<2x128xf32>
    %77 = vector.broadcast %55 : vector<1x128xf32> to vector<2x128xf32>
    %78 = arith.mulf %76, %77 : vector<2x128xf32>
    %79 = vector.broadcast %56 : vector<1x128xf32> to vector<2x128xf32>
    %80 = arith.addf %78, %79 : vector<2x128xf32>
    %81 = tpu.concatenate %26, %53, %80 in 1 : vector<2x128xf32>, vector<2x128xf32>, vector<2x128xf32> -> vector<2x384xf32>
    %82 = arith.truncf %81 : vector<2x384xf32> to vector<2x384xbf16>
    %c0_32 = arith.constant 0 : index
    %c0_33 = arith.constant 0 : index
    %83 = vector.load %arg3[%c0_32, %c0_33] : memref<384x128xbf16, #tpu.memory_space<vmem>>, vector<384x128xbf16>
    %cst_34 = arith.constant dense<0.000000e+00> : vector<2x128xf32>
    %84 = tpu.matmul %82, %83, %cst_34 {dimension_numbers = #tpu.dot_dimension_numbers<[1], [0], [0], [1], [0, 0, 1, 1], [], []>} : vector<2x384xbf16>, vector<384x128xbf16>, vector<2x128xf32> -> vector<2x128xf32>
    %c0_35 = arith.constant 0 : index
    %c0_36 = arith.constant 0 : index
    %85 = vector.load %arg4[%c0_35, %c0_36] : memref<1x128xf32, #tpu.memory_space<vmem>>, vector<1x128xf32>
    %86 = vector.broadcast %85 : vector<1x128xf32> to vector<2x128xf32>
    %87 = arith.addf %84, %86 : vector<2x128xf32>
    %cst_37 = arith.constant dense<0xFF800000> : vector<2xf32>
    %88 = vector.multi_reduction <maximumf>, %87, %cst_37 [1] : vector<2x128xf32> to vector<2xf32>
    %89 = vector.shape_cast %88 : vector<2xf32> to vector<2x1xf32>
    %90 = vector.broadcast %89 : vector<2x1xf32> to vector<2x128xf32>
    %91 = arith.subf %87, %90 : vector<2x128xf32>
    %92 = math.exp %91 : vector<2x128xf32>
    %cst_38 = arith.constant dense<0.000000e+00> : vector<2xf32>
    %93 = vector.multi_reduction <add>, %92, %cst_38 [1] : vector<2x128xf32> to vector<2xf32>
    %94 = vector.shape_cast %93 : vector<2xf32> to vector<2x1xf32>
    %95 = tpu.reciprocal %94 {approx = true} : vector<2x1xf32> -> vector<2x1xf32>
    %96 = vector.broadcast %95 : vector<2x1xf32> to vector<2x128xf32>
    %97 = arith.mulf %92, %96 : vector<2x128xf32>
    %c0_39 = arith.constant 0 : index
    %c0_40 = arith.constant 0 : index
    %98 = vector.load %arg5[%c0_39, %c0_40] : memref<2x128xf32, #tpu.memory_space<vmem>>, vector<2x128xf32>
    tpu.vector_store %arg5[%c0_39, %c0_40], %97 {strides = array<i32>} : memref<2x128xf32, #tpu.memory_space<vmem>>, vector<2x128xf32>,
    return
  }
}

</mosaic_0001>

<llo_original>
// kernel: multi_sequence_head.1
$region0: #{multi_sequence_head.1}
  #allocation0 [shape = 'u32[]', space=smem, size = 0x4, offset = 0x4, fixed_abs, tag = 'smem constant byte address 0x4 - core index']
  #allocation1 [shape = 'u32[144,128]{1,0:T(1,128)}', space=vmem, size = 0x12000, scoped, tag = 'internal scratch']
  %s0 = inlined_call_operand.vmem [shape: f32[2,384], index: 0, kind: input, shape index: {}]
  %s1 = inlined_call_operand.vmem [shape: f32[1,384], index: 1, kind: input, shape index: {}]
  %s2 = inlined_call_operand.vmem [shape: f32[1,384], index: 2, kind: input, shape index: {}]
  %s3 = inlined_call_operand.vmem [shape: bf16[384,128], index: 3, kind: input, shape index: {}]
  %s4 = inlined_call_operand.vmem [shape: f32[1,128], index: 4, kind: input, shape index: {}]
  %s5 = inlined_call_operand.hbm [shape: f32[2,128], index: 5, kind: output, shape index: {}]
  %s6 = sld [smem:[#allocation0]]
  $region30: #{multi_sequence_head.1} parent=0
    _
  %s8 = ssub.s32 1, %s6
  %s9 = scalar_select 0, %s8, %s6
  $region1: #{multi_sequence_head.1} parent=0
    #allocation2 [shape = 'u8[1024]{0}', space=vmem, size = 0x400, scoped, tag = 'output window, operand 0, single buffered']
    #allocation3 [shape = 's32[1]{0}', space=sflag, size = 0x4, scoped, tag = 'scoped memory for multi_sequence_head.1']
    %10 = vsyncpa [#allocation3], 0
    // Predicated region
    $region2: #{multi_sequence_head.1} parent=1 // pred_check
      _
    $region3: #{multi_sequence_head.1} parent=1 // pred_check_branch
      %12 = sbr.rel (0) target = $region5
    $region4: #{multi_sequence_head.1} parent=1 // pred_region
      _
    $region5: #{multi_sequence_head.1} parent=1 // pred_fallthru
      _
    // Predicated region
    $region6: #{multi_sequence_head.1} parent=1 // pred_check
      _
    $region7: #{multi_sequence_head.1} parent=1 // pred_check_branch
      %14 = sbr.rel (0) target = $region9
    $region8: #{multi_sequence_head.1} parent=1 // pred_region
      _
    $region9: #{multi_sequence_head.1} parent=1 // pred_fallthru
      _
    // Predicated region
    $region10: #{multi_sequence_head.1} parent=1 // pred_check
      _
    $region11: #{multi_sequence_head.1} parent=1 // pred_check_branch
      %16 = sbr.rel (0) target = $region13
    $region12: #{multi_sequence_head.1} parent=1 // pred_region
      _
    $region13: #{multi_sequence_head.1} parent=1 // pred_fallthru
      _
    // Predicated region
    $region14: #{multi_sequence_head.1} parent=1 // pred_check
      _
    $region15: #{multi_sequence_head.1} parent=1 // pred_check_branch
      %18 = sbr.rel (0) target = $region17
    $region16: #{multi_sequence_head.1} parent=1 // pred_region
      _
    $region17: #{multi_sequence_head.1} parent=1 // pred_fallthru
      _
    // Predicated region
    $region18: #{multi_sequence_head.1} parent=1 // pred_check
      _
    $region19: #{multi_sequence_head.1} parent=1 // pred_check_branch
      %20 = sbr.rel (0) target = $region21
    $region20: #{multi_sequence_head.1} parent=1 // pred_region
      _
    $region21: #{multi_sequence_head.1} parent=1 // pred_fallthru
      _
    %v22 = vld [vmem:[%s0] sm:$0x3]
    %v23 = vld [vmem:[%s1] sm:$0x1]
    %v24 = vld [vmem:[%s2] sm:$0x1]
    %vm25 = vcmask 1041408
    %v26 = vsel %vm25, %v22, 0.0
    %27 = vadd.xlane.f32.xlu0 %v26
    %v28 = vpop.xlane.xlu0 %27
    %v29 = vmul.f32 %v22, %v22
    %v30 = vsel %vm25, %v29, 0.0
    %31 = vadd.xlane.f32.xlu0 %v30
    %v32 = vpop.xlane.xlu0 %31
    %v33 = vmul.f32 %v28, 0.0078125
    %v34 = vmul.f32 %v32, 0.0078125
    %v35 = vmul.f32 %v33, %v33
    %v36 = vsub.f32 %v34, %v35
    %v37 = vmax.f32 %v36, 0.0
    %v38 = vsub.f32 %v22, %v33
    %v39 = vadd.f32 %v37, 1e-05
    %v40 = vrsqrt.pop %v39
    %v41 = vmul.f32 %v38, %v40
    %v43 = vlaneseq
    %v44 = vshrl.u32 %v43, 7
    %v45 = vsub.s32 0, %v44
    %v46 = vrot.slane %v23, %v45
    %v48 = vmul.f32 %v41, %v46
    %v50 = vlaneseq
    %v51 = vshrl.u32 %v50, 7
    %v52 = vsub.s32 0, %v51
    %v53 = vrot.slane %v24, %v52
    %v55 = vadd.f32 %v48, %v53
    %v56 = vld [vmem:[%s0 + $0x2] sm:$0x3]
    %v57 = vld [vmem:[%s1 + $0x1] sm:$0x1]
    %v58 = vld [vmem:[%s2 + $0x1] sm:$0x1]
    %v59 = vsel %vm25, %v56, 0.0
    %60 = vadd.xlane.f32.xlu0 %v59
    %v61 = vpop.xlane.xlu0 %60
    %v62 = vmul.f32 %v56, %v56
    %v63 = vsel %vm25, %v62, 0.0
    %64 = vadd.xlane.f32.xlu0 %v63
    %v65 = vpop.xlane.xlu0 %64
    %v66 = vmul.f32 %v61, 0.0078125
    %v67 = vmul.f32 %v65, 0.0078125
    %v68 = vmul.f32 %v66, %v66
    %v69 = vsub.f32 %v67, %v68
    %v70 = vmax.f32 %v69, 0.0
    %v71 = vsub.f32 %v56, %v66
    %v72 = vadd.f32 %v70, 1e-05
    %v73 = vrsqrt.pop %v72
    %v74 = vmul.f32 %v71, %v73
    %v76 = vlaneseq
    %v77 = vshrl.u32 %v76, 7
    %v78 = vsub.s32 0, %v77
    %v79 = vrot.slane %v57, %v78
    %v81 = vmul.f32 %v74, %v79
    %v83 = vlaneseq
    %v84 = vshrl.u32 %v83, 7
    %v85 = vsub.s32 0, %v84
    %v86 = vrot.slane %v58, %v85
    %v88 = vadd.f32 %v81, %v86
    %v89 = vld [vmem:[%s0 + $0x4] sm:$0x3]
    %v90 = vld [vmem:[%s1 + $0x2] sm:$0x1]
    %v91 = vld [vmem:[%s2 + $0x2] sm:$0x1]
    %v92 = vsel %vm25, %v89, 0.0
    %93 = vadd.xlane.f32.xlu0 %v92
    %v94 = vpop.xlane.xlu0 %93
    %v95 = vmul.f32 %v89, %v89
    %v96 = vsel %vm25, %v95, 0.0
    %97 = vadd.xlane.f32.xlu0 %v96
    %v98 = vpop.xlane.xlu0 %97
    %v99 = vmul.f32 %v94, 0.0078125
    %v100 = vmul.f32 %v98, 0.0078125
    %v101 = vmul.f32 %v99, %v99
    %v102 = vsub.f32 %v100, %v101
    %v103 = vmax.f32 %v102, 0.0
    %v104 = vsub.f32 %v89, %v99
    %v105 = vadd.f32 %v103, 1e-05
    %v106 = vrsqrt.pop %v105
    %v107 = vmul.f32 %v104, %v106
    %v109 = vlaneseq
    %v110 = vshrl.u32 %v109, 7
    %v111 = vsub.s32 0, %v110
    %v112 = vrot.slane %v90, %v111
    %v114 = vmul.f32 %v107, %v112
    %v116 = vlaneseq
    %v117 = vshrl.u32 %v116, 7
    %v118 = vsub.s32 0, %v117
    %v119 = vrot.slane %v91, %v118
    %v121 = vadd.f32 %v114, %v119
    %v122 = vpack.c.bf16 %v55, %v55
    %v123 = vpack.c.bf16 %v88, %v88
    %v124 = vpack.c.bf16 %v121, %v121
    %v125 = vld [vmem:[%s3] sm:$0xf]
    %v126 = vld [vmem:[%s3 + $0x4] sm:$0xf]
    %v127 = vld [vmem:[%s3 + $0x8] sm:$0xf]
    %v128 = vld [vmem:[%s3 + $0xc] sm:$0xf]
    %v129 = vld [vmem:[%s3 + $0x10] sm:$0xf]
    %v130 = vld [vmem:[%s3 + $0x14] sm:$0xf]
    %v131 = vld [vmem:[%s3 + $0x18] sm:$0xf]
    %v132 = vld [vmem:[%s3 + $0x1c] sm:$0xf]
    %v133 = vld [vmem:[%s3 + $0x20] sm:$0xf]
    %v134 = vld [vmem:[%s3 + $0x24] sm:$0xf]
    %v135 = vld [vmem:[%s3 + $0x28] sm:$0xf]
    %v136 = vld [vmem:[%s3 + $0x2c] sm:$0xf]
    %v137 = vld [vmem:[%s3 + $0x30] sm:$0xf]
    %v138 = vld [vmem:[%s3 + $0x34] sm:$0xf]
    %v139 = vld [vmem:[%s3 + $0x38] sm:$0xf]
    %v140 = vld [vmem:[%s3 + $0x3c] sm:$0xf]
    %v141 = vld [vmem:[%s3 + $0x40] sm:$0xf]
    %v142 = vld [vmem:[%s3 + $0x44] sm:$0xf]
    %v143 = vld [vmem:[%s3 + $0x48] sm:$0xf]
    %v144 = vld [vmem:[%s3 + $0x4c] sm:$0xf]
    %v145 = vld [vmem:[%s3 + $0x50] sm:$0xf]
    %v146 = vld [vmem:[%s3 + $0x54] sm:$0xf]
    %v147 = vld [vmem:[%s3 + $0x58] sm:$0xf]
    %v148 = vld [vmem:[%s3 + $0x5c] sm:$0xf]
    %v149 = vld [vmem:[%s3 + $0x60] sm:$0xf]
    %v150 = vld [vmem:[%s3 + $0x64] sm:$0xf]
    %v151 = vld [vmem:[%s3 + $0x68] sm:$0xf]
    %v152 = vld [vmem:[%s3 + $0x6c] sm:$0xf]
    %v153 = vld [vmem:[%s3 + $0x70] sm:$0xf]
    %v154 = vld [vmem:[%s3 + $0x74] sm:$0xf]
    %v155 = vld [vmem:[%s3 + $0x78] sm:$0xf]
    %v156 = vld [vmem:[%s3 + $0x7c] sm:$0xf]
    %v157 = vld [vmem:[%s3 + $0x80] sm:$0xf]
    %v158 = vld [vmem:[%s3 + $0x84] sm:$0xf]
    %v159 = vld [vmem:[%s3 + $0x88] sm:$0xf]
    %v160 = vld [vmem:[%s3 + $0x8c] sm:$0xf]
    %v161 = vld [vmem:[%s3 + $0x90] sm:$0xf]
    %v162 = vld [vmem:[%s3 + $0x94] sm:$0xf]
    %v163 = vld [vmem:[%s3 + $0x98] sm:$0xf]
    %v164 = vld [vmem:[%s3 + $0x9c] sm:$0xf]
    %v165 = vld [vmem:[%s3 + $0xa0] sm:$0xf]
    %v166 = vld [vmem:[%s3 + $0xa4] sm:$0xf]
    %v167 = vld [vmem:[%s3 + $0xa8] sm:$0xf]
    %v168 = vld [vmem:[%s3 + $0xac] sm:$0xf]
    %v169 = vld [vmem:[%s3 + $0xb0] sm:$0xf]
    %v170 = vld [vmem:[%s3 + $0xb4] sm:$0xf]
    %v171 = vld [vmem:[%s3 + $0xb8] sm:$0xf]
    %v172 = vld [vmem:[%s3 + $0xbc] sm:$0xf]
    %v173 = vld [vmem:[%s4] sm:$0x1]
    %v175 = vlaneseq
    %v176 = vshrl.u32 %v175, 7
    %v177 = vsub.s32 0, %v176
    %v178 = vrot.slane %v173, %v177
    %v228 = vunpack.c.l.b16 %v125
    %v229 = vunpack.c.l.b16 %v126
    %v230 = vunpack.c.l.b16 %v127
    %v231 = vunpack.c.l.b16 %v128
    %v232 = vunpack.c.l.b16 %v129
    %v233 = vunpack.c.l.b16 %v130
    %v234 = vunpack.c.l.b16 %v131
    %v235 = vunpack.c.l.b16 %v132
    %v236 = vunpack.c.l.b16 %v133
    %v237 = vunpack.c.l.b16 %v134
    %v238 = vunpack.c.l.b16 %v135
    %v239 = vunpack.c.l.b16 %v136
    %v240 = vunpack.c.l.b16 %v137
    %v241 = vunpack.c.l.b16 %v138
    %v242 = vunpack.c.l.b16 %v139
    %v243 = vunpack.c.l.b16 %v140
    %v244 = vunpack.c.l.b16 %v141
    %v245 = vunpack.c.l.b16 %v142
    %v246 = vunpack.c.l.b16 %v143
    %v247 = vunpack.c.l.b16 %v144
    %v248 = vunpack.c.l.b16 %v145
    %v249 = vunpack.c.l.b16 %v146
    %v250 = vunpack.c.l.b16 %v147
    %v251 = vunpack.c.l.b16 %v148
    %v252 = vunpack.c.l.b16 %v149
    %v253 = vunpack.c.l.b16 %v150
    %v254 = vunpack.c.l.b16 %v151
    %v255 = vunpack.c.l.b16 %v152
    %v256 = vunpack.c.l.b16 %v153
    %v257 = vunpack.c.l.b16 %v154
    %v258 = vunpack.c.l.b16 %v155
    %v259 = vunpack.c.l.b16 %v156
    %v260 = vunpack.c.l.b16 %v157
    %v261 = vunpack.c.l.b16 %v158
    %v262 = vunpack.c.l.b16 %v159
    %v263 = vunpack.c.l.b16 %v160
    %v264 = vunpack.c.l.b16 %v161
    %v265 = vunpack.c.l.b16 %v162
    %v266 = vunpack.c.l.b16 %v163
    %v267 = vunpack.c.l.b16 %v164
    %v268 = vunpack.c.l.b16 %v165
    %v269 = vunpack.c.l.b16 %v166
    %v270 = vunpack.c.l.b16 %v167
    %v271 = vunpack.c.l.b16 %v168
    %v272 = vunpack.c.l.b16 %v169
    %v273 = vunpack.c.l.b16 %v170
    %v274 = vunpack.c.l.b16 %v171
    %v275 = vunpack.c.l.b16 %v172
    %v276 = vpack.c.b16 %v229, %v228
    %v277 = vpack.c.b16 %v231, %v230
    %v278 = vpack.c.b16 %v233, %v232
    %v279 = vpack.c.b16 %v235, %v234
    %v280 = vpack.c.b16 %v237, %v236
    %v281 = vpack.c.b16 %v239, %v238
    %v282 = vpack.c.b16 %v241, %v240
    %v283 = vpack.c.b16 %v243, %v242
    %v284 = vpack.c.b16 %v245, %v244
    %v285 = vpack.c.b16 %v247, %v246
    %v286 = vpack.c.b16 %v249, %v248
    %v287 = vpack.c.b16 %v251, %v250
    %v288 = vpack.c.b16 %v253, %v252
    %v289 = vpack.c.b16 %v255, %v254
    %v290 = vpack.c.b16 %v257, %v256
    %v291 = vpack.c.b16 %v259, %v258
    %v292 = vpack.c.b16 %v261, %v260
    %v293 = vpack.c.b16 %v263, %v262
    %v294 = vpack.c.b16 %v265, %v264
    %v295 = vpack.c.b16 %v267, %v266
    %v296 = vpack.c.b16 %v269, %v268
    %v297 = vpack.c.b16 %v271, %v270
    %v298 = vpack.c.b16 %v273, %v272
    %v299 = vpack.c.b16 %v275, %v274
    %324 = vmatprep.subr.bf16.mxu0 0
    %325 = vmatpush1.bf16.msra.mxu0 %v276
    %326 = vmatprep.subr.bf16.mxu0 0
    %327 = vmatpush1.bf16.msra.mxu0 %v277
    %328 = vmatprep.subr.bf16.mxu0 0
    %329 = vmatpush1.bf16.msra.mxu0 %v278
    %330 = vmatprep.subr.bf16.mxu0 0
    %331 = vmatpush1.bf16.msra.mxu0 %v279
    %332 = vmatprep.subr.bf16.mxu0 0
    %333 = vmatpush1.bf16.msra.mxu0 %v280
    %334 = vmatprep.subr.bf16.mxu0 0
    %335 = vmatpush1.bf16.msra.mxu0 %v281
    %336 = vmatprep.subr.bf16.mxu0 0
    %337 = vmatpush1.bf16.msra.mxu0 %v282
    %338 = vmatprep.subr.bf16.mxu0 0
    %339 = vmatpush1.bf16.msra.mxu0 %v283
    %340 = vmatprep.subr.bf16.mxu0 0
    %341 = vmatpush1.bf16.msra.mxu0 %v284
    %342 = vmatprep.subr.bf16.mxu0 0
    %343 = vmatpush1.bf16.msra.mxu0 %v285
    %344 = vmatprep.subr.bf16.mxu0 0
    %345 = vmatpush1.bf16.msra.mxu0 %v286
    %346 = vmatprep.subr.bf16.mxu0 0
    %347 = vmatpush1.bf16.msra.mxu0 %v287
    %348 = vmatprep.subr.bf16.mxu0 0
    %349 = vmatpush1.bf16.msra.mxu0 %v288
    %350 = vmatprep.subr.bf16.mxu0 0
    %351 = vmatpush1.bf16.msra.mxu0 %v289
    %352 = vmatprep.subr.bf16.mxu0 0
    %353 = vmatpush1.bf16.msra.mxu0 %v290
    %354 = vmatprep.subr.bf16.mxu0 0
    %355 = vmatpush1.bf16.msra.mxu0 %v291
    %356 = vmatprep.mubr.bf16.mxu0 %v123
    %357 = vmatmul.mubr.bf16.gmra.mrb[0].mxu0 %v122
    %v358 = vpop.f32.mrb[0].mxu0
    %v359 = vadd.f32 %v178, %v358
    %v360 = vpop.f32.mrb[0].mxu0
    %v361 = vpop.f32.mrb[0].mxu0
    %v362 = vpop.f32.mrb[0].mxu0
    %363 = vdwg.mxu0
    %364 = vmatprep.subr.bf16.mxu0 0
    %365 = vmatpush1.bf16.msra.mxu0 %v292
    %366 = vmatprep.subr.bf16.mxu0 0
    %367 = vmatpush1.bf16.msra.mxu0 %v293
    %368 = vmatprep.subr.bf16.mxu0 0
    %369 = vmatpush1.bf16.msra.mxu0 %v294
    %370 = vmatprep.subr.bf16.mxu0 0
    %371 = vmatpush1.bf16.msra.mxu0 %v295
    %372 = vmatprep.subr.bf16.mxu0 0
    %373 = vmatpush1.bf16.msra.mxu0 %v296
    %374 = vmatprep.subr.bf16.mxu0 0
    %375 = vmatpush1.bf16.msra.mxu0 %v297
    %376 = vmatprep.subr.bf16.mxu0 0
    %377 = vmatpush1.bf16.msra.mxu0 %v298
    %378 = vmatprep.subr.bf16.mxu0 0
    %379 = vmatpush1.bf16.msra.mxu0 %v299
    %380 = vmatprep.subr.bf16.mxu0 0
    %381 = vmatpush1.bf16.msra.mxu0 0
    %382 = vmatprep.subr.bf16.mxu0 0
    %383 = vmatpush1.bf16.msra.mxu0 0
    %384 = vmatprep.subr.bf16.mxu0 0
    %385 = vmatpush1.bf16.msra.mxu0 0
    %386 = vmatprep.subr.bf16.mxu0 0
    %387 = vmatpush1.bf16.msra.mxu0 0
    %388 = vmatprep.subr.bf16.mxu0 0
    %389 = vmatpush1.bf16.msra.mxu0 0
    %390 = vmatprep.subr.bf16.mxu0 0
    %391 = vmatpush1.bf16.msra.mxu0 0
    %392 = vmatprep.subr.bf16.mxu0 0
    %393 = vmatpush1.bf16.msra.mxu0 0
    %394 = vmatprep.subr.bf16.mxu0 0
    %395 = vmatpush1.bf16.msra.mxu0 0
    %396 = vmatprep.mubr.bf16.mxu0 0
    %397 = vmatmul.mubr.bf16.gmra.mrb[0].mxu0 %v124
    %v398 = vpop.f32.mrb[0].mxu0
    %v399 = vadd.f32 %v359, %v398
    %v400 = vpop.f32.mrb[0].mxu0
    %v401 = vpop.f32.mrb[0].mxu0
    %v402 = vpop.f32.mrb[0].mxu0
    %403 = vdwg.mxu0
    %v404 = vsel %vm25, %v399, -inf
    %405 = vmax.xlane.f32.xlu0 %v404
    %v406 = vpop.xlane.xlu0 %405
    %v407 = vsub.f32 %v399, %v406
    %v408 = vmul.f32 %v407, 1.442695
    %v409 = vpow.pop %v408
    %v410 = vsel %vm25, %v409, 0.0
    %411 = vadd.xlane.f32.xlu0 %v410
    %v412 = vpop.xlane.xlu0 %411
    %v413 = vrcp.pop %v412
    %v414 = vmul.f32 %v409, %v413
    %415 = vst [vmem:[#allocation2] sm:$0x3] %v414
    // Predicated region
    $region22: #{multi_sequence_head.1} parent=1 // pred_check
      _
    $region23: #{multi_sequence_head.1} parent=1 // pred_check_branch
      %417 = sbr.rel (0) target = $region25
    $region24: #{multi_sequence_head.1} parent=1 // pred_region
      %s419 = ssub.s32 32, 32
      %420 = vsyncadd [#allocation3], %s419
      %s422 = sshll.u32 [#allocation2], 4
      %s423 = int_to_ptr.vmem [resolvable:$true] %s422
      %425 = dma.vmem_to_hbm [thread:$0]  %s423, 32, %s5, [#allocation3]
    $region25: #{multi_sequence_head.1} parent=1 // pred_fallthru
      _
    // Predicated region
    $region26: #{multi_sequence_head.1} parent=1 // pred_check
      _
    $region27: #{multi_sequence_head.1} parent=1 // pred_check_branch
      %427 = sbr.rel (0) target = $region29
    $region28: #{multi_sequence_head.1} parent=1 // pred_region
      %428 = dma.done [#allocation3], 32
    $region29: #{multi_sequence_head.1} parent=1 // pred_fallthru
      _
    %429 = vsyncpa [#allocation3], 1

</llo_original>
